<compile_context>
chip_gen: v6e
topology: v6e:2x2x1
jax: 0.10.0
libtpu: 0.0.40
codegen_flags: <defaults>
</compile_context>

<pallas_src>
import math
import jax
import jax.numpy as jnp
from jax.experimental import pallas as pl
from jax.experimental.pallas import tpu as pltpu

# ----------------------------- configuration ------------------------------
STATE_DIM = 16
ACTION_DIM = 4
HIDDEN = (32, 32)
ENC_SPINE_DIM = 10       # encoder population size per obs dim
DEC_DIM = 10             # decoder population size per action dim
MEAN_RANGE = (-3.0, 3.0)
STD = math.sqrt(0.15)
MAX_ACTION = 2.0
BATCH = 2

SD = STATE_DIM * ENC_SPINE_DIM     # encoder neuron count  (160)
AD = ACTION_DIM * DEC_DIM          # l3 output size        (40)
H = HIDDEN[0]                      # MLP width             (32)


def _round_up(x, m):
    return (x + m - 1) // m * m


def _cdiv(a, b):
    return -(-a // b)


# ---- packed weight-slab layout (rows 8-aligned, width = SD = 160) ---------
R_W1T = 0                      # rows [0, 32)   : w1^T            (32, 160)
R_W2T = H                      # rows [32, 64)  : w2^T in cols [0:32)
C_B1 = H                       #                  b1 column at col 32
C_B2 = H + 1                   #                  b2 column at col 33
R_W3T = 2 * H                  # rows [64, 72)  : folded w3'^T in cols [0:32) (rows 4..7 zero)
C_B3 = H                       #                  folded b3' column at col 32
R_REPT = _round_up(R_W3T + 8, 8)   # rows [72, 232): (rep/std)^T in cols [0:16)
C_ENCB = STATE_DIM                 #                  (-mean/std) column at col 16
SLAB_ROWS = R_REPT + SD            # 232 (multiple of 8)


# ------------------------------- kernel -----------------------------------
def actor_spine_kernel(xt_ref, w_ref, out_ref):
    xt = xt_ref[...]                                              # (S, bt)

    # population-coding encoder, normalization pre-folded into rep/bias
    rep_t = w_ref[R_REPT:R_REPT + SD, 0:STATE_DIM]                # (160, 16) = (rep/std)^T
    enc_b = w_ref[R_REPT:R_REPT + SD, C_ENCB:C_ENCB + 1]          # (160, 1)  = -mean/std
    z = jnp.dot(rep_t, xt, preferred_element_type=jnp.float32) + enc_b
    spine = 0.5 * jnp.tanh(0.5 * z) + 0.5                         # sigmoid via one EUP tanh

    # MLP trunk (all matmuls have N = bt lanes)
    w1t = w_ref[R_W1T:R_W1T + H, :]                               # (32, 160)
    b1 = w_ref[R_W2T:R_W2T + H, C_B1:C_B1 + 1]                    # (32, 1)
    h1 = jnp.maximum(
        jnp.dot(w1t, spine, preferred_element_type=jnp.float32) + b1, 0.0)

    w2t = w_ref[R_W2T:R_W2T + H, 0:H]                             # (32, 32)
    b2 = w_ref[R_W2T:R_W2T + H, C_B2:C_B2 + 1]                    # (32, 1)
    h2 = jnp.maximum(
        jnp.dot(w2t, h1, preferred_element_type=jnp.float32) + b2, 0.0)

    # l3 with decoder folded in (rows >= ACTION_DIM of w3t/b3 are zero pad)
    w3t = w_ref[R_W3T:R_W3T + 8, 0:H]                             # (8, 32)
    b3 = w_ref[R_W3T:R_W3T + 8, C_B3:C_B3 + 1]                    # (8, 1)
    pre = jnp.dot(w3t, h2, preferred_element_type=jnp.float32) + b3   # (8, bt)

    out_ref[...] = (MAX_ACTION * jnp.tanh(pre[:ACTION_DIM, :])).astype(out_ref.dtype)


# ------------------------------- params -----------------------------------
def make_params(key):
    ks = jax.random.split(key, 8)

    def linear(kw, kb, fan_in, fan_out):
        bound = 1.0 / math.sqrt(fan_in)
        w = jax.random.uniform(kw, (fan_in, fan_out), jnp.float32, -bound, bound)
        b = jax.random.uniform(kb, (1, fan_out), jnp.float32, -bound, bound)
        return w, b

    w1, b1 = linear(ks[0], ks[1], SD, HIDDEN[0])
    w2, b2 = linear(ks[2], ks[3], HIDDEN[0], HIDDEN[1])
    w3, b3 = linear(ks[4], ks[5], HIDDEN[1], AD)

    # decoder: Conv1d(A, A, Dd, groups=A) -> weight (A, 1, Dd), bias (A,)
    bound = 1.0 / math.sqrt(DEC_DIM)
    wdec = jax.random.uniform(ks[6], (ACTION_DIM, DEC_DIM), jnp.float32, -bound, bound)
    bdec = jax.random.uniform(ks[7], (1, ACTION_DIM), jnp.float32, -bound, bound)
    wdec_flat = wdec.reshape(1, AD)                 # wdec_flat[0, j*Dd+k] = wdec[j, k]

    # encoder mean/std (linspace over the population, same for every obs dim)
    means = jnp.linspace(MEAN_RANGE[0], MEAN_RANGE[1], ENC_SPINE_DIM, dtype=jnp.float32)
    mean_flat = jnp.tile(means, STATE_DIM).reshape(1, SD)
    std_flat = jnp.full((1, SD), STD, jnp.float32)

    # constant 0/1 matrices: obs replication / per-action segmented sum
    rep = jnp.repeat(jnp.eye(STATE_DIM, dtype=jnp.float32), ENC_SPINE_DIM, axis=1)   # (S, S*De)
    seg = jnp.repeat(jnp.eye(ACTION_DIM, dtype=jnp.float32), DEC_DIM, axis=0)        # (A*Dd, A)

    # -------- constant folding (exact) -------------------------------------
    rep_scaled = rep / STD                          # (S, S*De)
    enc_bias = -mean_flat / STD                     # (1, S*De)
    w3_fold = (w3 * wdec_flat) @ seg                # (H, A)
    b3_fold = (b3 * wdec_flat) @ seg + bdec         # (1, A)

    # -------- single packed, pre-transposed weight slab ---------------------
    slab = jnp.zeros((SLAB_ROWS, SD), jnp.float32)
    slab = slab.at[R_W1T:R_W1T + H, :].set(w1.T)                          # (32,160)
    slab = slab.at[R_W2T:R_W2T + H, 0:H].set(w2.T)                        # (32,32)
    slab = slab.at[R_W2T:R_W2T + H, C_B1].set(b1[0])
    slab = slab.at[R_W2T:R_W2T + H, C_B2].set(b2[0])
    slab = slab.at[R_W3T:R_W3T + ACTION_DIM, 0:H].set(w3_fold.T)          # (4,32)
    slab = slab.at[R_W3T:R_W3T + ACTION_DIM, C_B3].set(b3_fold[0])
    slab = slab.at[R_REPT:R_REPT + SD, 0:STATE_DIM].set(rep_scaled.T)     # (160,16)
    slab = slab.at[R_REPT:R_REPT + SD, C_ENCB].set(enc_bias[0])

    # raw params kept for the pure-JAX reference; the slab feeds the kernel.
    return dict(rep=rep, mean=mean_flat, std=std_flat,
                w1=w1, b1=b1, w2=w2, b2=b2, w3=w3, b3=b3,
                wdec=wdec_flat, seg=seg, bdec=bdec,
                w_slab=slab)


# ------------------------------- wrapper -----------------------------------
def actor_spine_forward(state, p, *, max_batch_tile=1024):
    """state: (B, STATE_DIM) f32 -> (B, ACTION_DIM) f32."""
    B = state.shape[0]
    w_slab = p["w_slab"]
    xt = state.T                                   # batch -> lane axis, (S, B)

    compiler_params = pltpu.CompilerParams(
        dimension_semantics=("parallel",))         # batch axis: megacore-shardable

    if B <= max_batch_tile:
        # Small-batch / latency fast path: one grid step, full-array blocks
        # (exempt from the (8,128) divisibility rule), no pad / slice ops.
        out_t = pl.pallas_call(
            actor_spine_kernel,
            out_shape=jax.ShapeDtypeStruct((ACTION_DIM, B), jnp.float32),
            grid=(1,),
            in_specs=[
                pl.BlockSpec((STATE_DIM, B), lambda i: (0, 0)),
                pl.BlockSpec(w_slab.shape, lambda i: (0, 0)),
            ],
            out_specs=pl.BlockSpec((ACTION_DIM, B), lambda i: (0, 0)),
            compiler_params=compiler_params,
        )(xt, w_slab)
        return out_t.T

    # Large-batch path: minimal-pad tiling with bt a multiple of 256
    # (fills the 256-wide MXU on v6e/v7x; also a multiple of v5e's 128).
    # B > max_batch_tile => >= 2 grid steps => both v7x TensorCores used.
    n_steps = _cdiv(B, max_batch_tile)
    bt = _round_up(_cdiv(B, n_steps), 256)
    Bp = n_steps * bt
    if Bp != B:
        xt = jnp.pad(xt, ((0, 0), (0, Bp - B)))

    out_t = pl.pallas_call(
        actor_spine_kernel,
        out_shape=jax.ShapeDtypeStruct((ACTION_DIM, Bp), jnp.float32),
        grid=(n_steps,),
        in_specs=[
            pl.BlockSpec((STATE_DIM, bt), lambda i: (0, i)),
            pl.BlockSpec(w_slab.shape, lambda i: (0, 0)),    # VMEM-resident weights
        ],
        out_specs=pl.BlockSpec((ACTION_DIM, bt), lambda i: (0, i)),
        compiler_params=compiler_params,
    )(xt, w_slab)
    return out_t[:, :B].T


# ------------------------------ reference ----------------------------------
def actor_spine_reference(state, p):
    obs_rep = state @ p["rep"]
    spine = jax.nn.sigmoid((obs_rep - p["mean"]) / p["std"])
    h1 = jax.nn.relu(spine @ p["w1"] + p["b1"])
    h2 = jax.nn.relu(h1 @ p["w2"] + p["b2"])
    a = h2 @ p["w3"] + p["b3"]
    pre = (a * p["wdec"]) @ p["seg"] + p["bdec"]
    return MAX_ACTION * jnp.tanh(pre)


if __name__ == "__main__":
    key = jax.random.PRNGKey(0)
    k_param, k_state, k_big = jax.random.split(key, 3)
    params = make_params(k_param)

    # Latency path (RL actor step): B = 2, single grid step, no padding.
    state = jax.random.normal(k_state, (BATCH, STATE_DIM), jnp.float32)
    out = jax.block_until_ready(actor_spine_forward(state, params))
    ref = actor_spine_reference(state, params)
    assert out.shape == (BATCH, ACTION_DIM)
    assert jnp.allclose(out, ref, atol=1e-4, rtol=1e-4), (out, ref)

    # Throughput path: exercises minimal-pad multi-step tiling (2 grid steps).
    big_state = jax.random.normal(k_big, (1500, STATE_DIM), jnp.float32)
    big_out = jax.block_until_ready(actor_spine_forward(big_state, params))
    big_ref = actor_spine_reference(big_state, params)
    assert big_out.shape == (1500, ACTION_DIM)
    assert jnp.allclose(big_out, big_ref, atol=1e-4, rtol=1e-4)

    print("KERNEL_OK")
</pallas_src>

<mosaic_0001>
module attributes {stable_mosaic.version = 11 : i64} {
  func.func @actor_spine_kernel(%arg0: i32, %arg1: memref<16x2xf32, #tpu.memory_space<vmem>>, %arg2: memref<232x160xf32, #tpu.memory_space<vmem>>, %arg3: memref<4x2xf32, #tpu.memory_space<vmem>>) attributes {dimension_semantics = [#tpu.dimension_semantics<parallel>], iteration_bounds = array<i64: 1>, scalar_prefetch = 0 : i64, scratch_operands = 0 : i64, tpu.core_type = #tpu.core_type<tc>, window_params = [{pipeline_mode = #tpu.pipeline_mode<synchronous>, transform_indices = @transform_0, window_bounds = array<i64: 16, 2>}, {pipeline_mode = #tpu.pipeline_mode<synchronous>, transform_indices = @transform_1, window_bounds = array<i64: 232, 160>}, {pipeline_mode = #tpu.pipeline_mode<synchronous>, transform_indices = @transform_2, window_bounds = array<i64: 4, 2>}]} {
    %c0 = arith.constant 0 : index
    %c0_0 = arith.constant 0 : index
    %0 = vector.load %arg1[%c0, %c0_0] : memref<16x2xf32, #tpu.memory_space<vmem>>, vector<16x2xf32>
    %c72 = arith.constant 72 : index
    %c0_1 = arith.constant 0 : index
    %1 = vector.load %arg2[%c72, %c0_1] : memref<232x160xf32, #tpu.memory_space<vmem>>, vector<160x16xf32>
    %c72_2 = arith.constant 72 : index
    %c16 = arith.constant 16 : index
    %2 = vector.load %arg2[%c72_2, %c16] : memref<232x160xf32, #tpu.memory_space<vmem>>, vector<160x1xf32>
    %cst = arith.constant dense<0.000000e+00> : vector<160x2xf32>
    %3 = tpu.matmul %1, %0, %cst {dimension_numbers = #tpu.dot_dimension_numbers<[1], [0], [0], [1], [0, 0, 1, 1], [], []>} : vector<160x16xf32>, vector<16x2xf32>, vector<160x2xf32> -> vector<160x2xf32>
    %4 = vector.broadcast %2 : vector<160x1xf32> to vector<160x2xf32>
    %5 = arith.addf %3, %4 : vector<160x2xf32>
    %cst_3 = arith.constant 5.000000e-01 : f32
    %6 = vector.broadcast %cst_3 : f32 to vector<160x2xf32>
    %7 = arith.mulf %6, %5 : vector<160x2xf32>
    %8 = math.tanh %7 : vector<160x2xf32>
    %cst_4 = arith.constant 5.000000e-01 : f32
    %9 = vector.broadcast %cst_4 : f32 to vector<160x2xf32>
    %10 = arith.mulf %9, %8 : vector<160x2xf32>
    %cst_5 = arith.constant 5.000000e-01 : f32
    %11 = vector.broadcast %cst_5 : f32 to vector<160x2xf32>
    %12 = arith.addf %10, %11 : vector<160x2xf32>
    %c0_6 = arith.constant 0 : index
    %c0_7 = arith.constant 0 : index
    %13 = vector.load %arg2[%c0_6, %c0_7] : memref<232x160xf32, #tpu.memory_space<vmem>>, vector<32x160xf32>
    %c32 = arith.constant 32 : index
    %c32_8 = arith.constant 32 : index
    %14 = vector.load %arg2[%c32, %c32_8] : memref<232x160xf32, #tpu.memory_space<vmem>>, vector<32x1xf32>
    %cst_9 = arith.constant dense<0.000000e+00> : vector<32x2xf32>
    %15 = tpu.matmul %13, %12, %cst_9 {dimension_numbers = #tpu.dot_dimension_numbers<[1], [0], [0], [1], [0, 0, 1, 1], [], []>} : vector<32x160xf32>, vector<160x2xf32>, vector<32x2xf32> -> vector<32x2xf32>
    %16 = vector.broadcast %14 : vector<32x1xf32> to vector<32x2xf32>
    %17 = arith.addf %15, %16 : vector<32x2xf32>
    %cst_10 = arith.constant 0.000000e+00 : f32
    %18 = vector.broadcast %cst_10 : f32 to vector<32x2xf32>
    %19 = arith.maximumf %17, %18 : vector<32x2xf32>
    %c32_11 = arith.constant 32 : index
    %c0_12 = arith.constant 0 : index
    %20 = vector.load %arg2[%c32_11, %c0_12] : memref<232x160xf32, #tpu.memory_space<vmem>>, vector<32x32xf32>
    %c32_13 = arith.constant 32 : index
    %c33 = arith.constant 33 : index
    %21 = vector.load %arg2[%c32_13, %c33] : memref<232x160xf32, #tpu.memory_space<vmem>>, vector<32x1xf32>
    %cst_14 = arith.constant dense<0.000000e+00> : vector<32x2xf32>
    %22 = tpu.matmul %20, %19, %cst_14 {dimension_numbers = #tpu.dot_dimension_numbers<[1], [0], [0], [1], [0, 0, 1, 1], [], []>} : vector<32x32xf32>, vector<32x2xf32>, vector<32x2xf32> -> vector<32x2xf32>
    %23 = vector.broadcast %21 : vector<32x1xf32> to vector<32x2xf32>
    %24 = arith.addf %22, %23 : vector<32x2xf32>
    %cst_15 = arith.constant 0.000000e+00 : f32
    %25 = vector.broadcast %cst_15 : f32 to vector<32x2xf32>
    %26 = arith.maximumf %24, %25 : vector<32x2xf32>
    %c64 = arith.constant 64 : index
    %c0_16 = arith.constant 0 : index
    %27 = vector.load %arg2[%c64, %c0_16] : memref<232x160xf32, #tpu.memory_space<vmem>>, vector<8x32xf32>
    %c64_17 = arith.constant 64 : index
    %c32_18 = arith.constant 32 : index
    %28 = vector.load %arg2[%c64_17, %c32_18] : memref<232x160xf32, #tpu.memory_space<vmem>>, vector<8x1xf32>
    %cst_19 = arith.constant dense<0.000000e+00> : vector<8x2xf32>
    %29 = tpu.matmul %27, %26, %cst_19 {dimension_numbers = #tpu.dot_dimension_numbers<[1], [0], [0], [1], [0, 0, 1, 1], [], []>} : vector<8x32xf32>, vector<32x2xf32>, vector<8x2xf32> -> vector<8x2xf32>
    %30 = vector.broadcast %28 : vector<8x1xf32> to vector<8x2xf32>
    %31 = arith.addf %29, %30 : vector<8x2xf32>
    %32 = vector.extract_strided_slice %31 {offsets = [0, 0], sizes = [4, 2], strides = [1, 1]} : vector<8x2xf32> to vector<4x2xf32>
    %33 = math.tanh %32 : vector<4x2xf32>
    %cst_20 = arith.constant 2.000000e+00 : f32
    %34 = vector.broadcast %cst_20 : f32 to vector<4x2xf32>
    %35 = arith.mulf %34, %33 : vector<4x2xf32>
    %c0_21 = arith.constant 0 : index
    %c0_22 = arith.constant 0 : index
    %36 = vector.load %arg3[%c0_21, %c0_22] : memref<4x2xf32, #tpu.memory_space<vmem>>, vector<4x2xf32>
    tpu.vector_store %arg3[%c0_21, %c0_22], %35 {strides = array<i32>} : memref<4x2xf32, #tpu.memory_space<vmem>>, vector<4x2xf32>,
    return
  }
  func.func @transform_0(%arg0: i32) -> (i32, i32) {
    %c0_i32 = arith.constant 0 : i32
    %c0_i32_0 = arith.constant 0 : i32
    %c0_i32_1 = arith.constant 0 : i32
    return %c0_i32, %c0_i32_0 : i32, i32
  }
  func.func @transform_1(%arg0: i32) -> (i32, i32) {
    %c0_i32 = arith.constant 0 : i32
    %c0_i32_0 = arith.constant 0 : i32
    %c0_i32_1 = arith.constant 0 : i32
    return %c0_i32, %c0_i32_0 : i32, i32
  }
  func.func @transform_2(%arg0: i32) -> (i32, i32) {
    %c0_i32 = arith.constant 0 : i32
    %c0_i32_0 = arith.constant 0 : i32
    %c0_i32_1 = arith.constant 0 : i32
    return %c0_i32, %c0_i32_0 : i32, i32
  }
}

</mosaic_0001>

<llo_original>
// kernel: tpu_custom_call.1
$region0: #{tpu_custom_call.1}
  #allocation0 [shape = 'u32[]', space=smem, size = 0x4, offset = 0x4, fixed_abs, tag = 'smem constant byte address 0x4 - core index']
  #allocation1 [shape = 'u32[144,128]{1,0:T(1,128)}', space=vmem, size = 0x12000, scoped, tag = 'internal scratch']
  %s0 = inlined_call_operand.vmem [shape: f32[16,2], index: 0, kind: input, shape index: {}]
  %s1 = inlined_call_operand.vmem [shape: f32[232,160], index: 1, kind: input, shape index: {}]
  %s2 = inlined_call_operand.vmem [shape: f32[4,2], index: 2, kind: output, shape index: {}]
  %s3 = sld [smem:[#allocation0]]
  $region18: #{tpu_custom_call.1} parent=0
    _
  %s5 = ssub.s32 1, %s3
  %s6 = scalar_select 0, %s5, %s3
  // Predicated region
  $region2: #{tpu_custom_call.1} parent=0 // pred_check
    _
  $region3: #{tpu_custom_call.1} parent=0 // pred_check_branch
    %8 = sbr.rel (0) target = $region5
  $region4: #{tpu_custom_call.1} parent=0 // pred_region
    _
  $region5: #{tpu_custom_call.1} parent=0 // pred_fallthru
    _
  // Predicated region
  $region6: #{tpu_custom_call.1} parent=0 // pred_check
    _
  $region7: #{tpu_custom_call.1} parent=0 // pred_check_branch
    %10 = sbr.rel (0) target = $region9
  $region8: #{tpu_custom_call.1} parent=0 // pred_region
    _
  $region9: #{tpu_custom_call.1} parent=0 // pred_fallthru
    _
  %v11 = vld [vmem:[%s0] sm:$0xff]
  %v12 = vld [vmem:[%s0 + $0x8] sm:$0xff]
  %v13 = vld [vmem:[%s1 + $0x90] sm:$0xff]
  %v14 = vld [vmem:[%s1 + $0xa0] sm:$0xff]
  %v15 = vld [vmem:[%s1 + $0xb0] sm:$0xff]
  %v16 = vld [vmem:[%s1 + $0xc0] sm:$0xff]
  %v17 = vld [vmem:[%s1 + $0xd0] sm:$0xff]
  %v18 = vld [vmem:[%s1 + $0xe0] sm:$0xff]
  %v19 = vld [vmem:[%s1 + $0xf0] sm:$0xff]
  %v20 = vld [vmem:[%s1 + $0x100] sm:$0xff]
  %v21 = vld [vmem:[%s1 + $0x110] sm:$0xff]
  %v22 = vld [vmem:[%s1 + $0x120] sm:$0xff]
  %v23 = vld [vmem:[%s1 + $0x130] sm:$0xff]
  %v24 = vld [vmem:[%s1 + $0x140] sm:$0xff]
  %v25 = vld [vmem:[%s1 + $0x150] sm:$0xff]
  %v26 = vld [vmem:[%s1 + $0x160] sm:$0xff]
  %v27 = vld [vmem:[%s1 + $0x170] sm:$0xff]
  %v28 = vld [vmem:[%s1 + $0x180] sm:$0xff]
  %v29 = vld [vmem:[%s1 + $0x190] sm:$0xff]
  %v30 = vld [vmem:[%s1 + $0x1a0] sm:$0xff]
  %v31 = vld [vmem:[%s1 + $0x1b0] sm:$0xff]
  %v32 = vld [vmem:[%s1 + $0x1c0] sm:$0xff]
  %34 = vset.pattern.permute.xlu0 16
  %35 = vperm.xlu0 %34, %v13
  %v36 = vpop.permute.xlu0 %35
  %39 = vset.pattern.permute.xlu0 16
  %40 = vperm.xlu0 %39, %v14
  %v41 = vpop.permute.xlu0 %40
  %44 = vset.pattern.permute.xlu0 16
  %45 = vperm.xlu0 %44, %v15
  %v46 = vpop.permute.xlu0 %45
  %49 = vset.pattern.permute.xlu0 16
  %50 = vperm.xlu0 %49, %v16
  %v51 = vpop.permute.xlu0 %50
  %54 = vset.pattern.permute.xlu0 16
  %55 = vperm.xlu0 %54, %v17
  %v56 = vpop.permute.xlu0 %55
  %59 = vset.pattern.permute.xlu0 16
  %60 = vperm.xlu0 %59, %v18
  %v61 = vpop.permute.xlu0 %60
  %64 = vset.pattern.permute.xlu0 16
  %65 = vperm.xlu0 %64, %v19
  %v66 = vpop.permute.xlu0 %65
  %69 = vset.pattern.permute.xlu0 16
  %70 = vperm.xlu0 %69, %v20
  %v71 = vpop.permute.xlu0 %70
  %74 = vset.pattern.permute.xlu0 16
  %75 = vperm.xlu0 %74, %v21
  %v76 = vpop.permute.xlu0 %75
  %79 = vset.pattern.permute.xlu0 16
  %80 = vperm.xlu0 %79, %v22
  %v81 = vpop.permute.xlu0 %80
  %84 = vset.pattern.permute.xlu0 16
  %85 = vperm.xlu0 %84, %v23
  %v86 = vpop.permute.xlu0 %85
  %89 = vset.pattern.permute.xlu0 16
  %90 = vperm.xlu0 %89, %v24
  %v91 = vpop.permute.xlu0 %90
  %94 = vset.pattern.permute.xlu0 16
  %95 = vperm.xlu0 %94, %v25
  %v96 = vpop.permute.xlu0 %95
  %99 = vset.pattern.permute.xlu0 16
  %100 = vperm.xlu0 %99, %v26
  %v101 = vpop.permute.xlu0 %100
  %104 = vset.pattern.permute.xlu0 16
  %105 = vperm.xlu0 %104, %v27
  %v106 = vpop.permute.xlu0 %105
  %109 = vset.pattern.permute.xlu0 16
  %110 = vperm.xlu0 %109, %v28
  %v111 = vpop.permute.xlu0 %110
  %114 = vset.pattern.permute.xlu0 16
  %115 = vperm.xlu0 %114, %v29
  %v116 = vpop.permute.xlu0 %115
  %119 = vset.pattern.permute.xlu0 16
  %120 = vperm.xlu0 %119, %v30
  %v121 = vpop.permute.xlu0 %120
  %124 = vset.pattern.permute.xlu0 16
  %125 = vperm.xlu0 %124, %v31
  %v126 = vpop.permute.xlu0 %125
  %129 = vset.pattern.permute.xlu0 16
  %130 = vperm.xlu0 %129, %v32
  %v131 = vpop.permute.xlu0 %130
  %vm133 = vcmask 130048
  %v134 = vsel %vm133, %v13, 0
  %v136 = vsel %vm133, %v14, 0
  %v138 = vsel %vm133, %v15, 0
  %v140 = vsel %vm133, %v16, 0
  %v142 = vsel %vm133, %v17, 0
  %v144 = vsel %vm133, %v18, 0
  %v146 = vsel %vm133, %v19, 0
  %v148 = vsel %vm133, %v20, 0
  %v150 = vsel %vm133, %v21, 0
  %v152 = vsel %vm133, %v22, 0
  %v154 = vsel %vm133, %v23, 0
  %v156 = vsel %vm133, %v24, 0
  %v158 = vsel %vm133, %v25, 0
  %v160 = vsel %vm133, %v26, 0
  %v162 = vsel %vm133, %v27, 0
  %v164 = vsel %vm133, %v28, 0
  %v166 = vsel %vm133, %v29, 0
  %v168 = vsel %vm133, %v30, 0
  %v170 = vsel %vm133, %v31, 0
  %v172 = vsel %vm133, %v32, 0
  %174 = vmatprep.subr.mxu0 0.0
  %175 = vmatpush1.msra.mxu0 0.0
  %176 = vmatprep.subr.mxu0 0.0
  %177 = vmatpush1.msra.mxu0 0.0
  %178 = vmatprep.subr.mxu0 0.0
  %179 = vmatpush1.msra.mxu0 0.0
  %180 = vmatprep.subr.mxu0 0.0
  %181 = vmatpush1.msra.mxu0 0.0
  %182 = vmatprep.subr.mxu0 0.0
  %183 = vmatpush1.msra.mxu0 0.0
  %184 = vmatprep.subr.mxu0 0.0
  %185 = vmatpush1.msra.mxu0 0.0
  %186 = vmatprep.subr.mxu0 0.0
  %187 = vmatpush1.msra.mxu0 0.0
  %188 = vmatprep.subr.mxu0 0.0
  %189 = vmatpush1.msra.mxu0 0.0
  %190 = vmatprep.subr.mxu0 0.0
  %191 = vmatpush1.msra.mxu0 0.0
  %192 = vmatprep.subr.mxu0 0.0
  %193 = vmatpush1.msra.mxu0 0.0
  %194 = vmatprep.subr.mxu0 0.0
  %195 = vmatpush1.msra.mxu0 0.0
  %196 = vmatprep.subr.mxu0 0.0
  %197 = vmatpush1.msra.mxu0 0.0
  %198 = vmatprep.subr.mxu0 0.0
  %199 = vmatpush1.msra.mxu0 0.0
  %200 = vmatprep.subr.mxu0 0.0
  %201 = vmatpush1.msra.mxu0 0.0
  %202 = vmatprep.subr.mxu0 0.0
  %203 = vmatpush1.msra.mxu0 %v12
  %204 = vmatprep.subr.mxu0 0.0
  %205 = vmatpush1.msra.mxu0 %v11
  %206 = vmatprep.subr.mxu0 0.0
  %207 = vmatpush2.msra.mxu0 0.0
  %208 = vmatprep.subr.mxu0 0.0
  %209 = vmatpush2.msra.mxu0 0.0
  %210 = vmatprep.subr.mxu0 0.0
  %211 = vmatpush2.msra.mxu0 0.0
  %212 = vmatprep.subr.mxu0 0.0
  %213 = vmatpush2.msra.mxu0 0.0
  %214 = vmatprep.subr.mxu0 0.0
  %215 = vmatpush2.msra.mxu0 0.0
  %216 = vmatprep.subr.mxu0 0.0
  %217 = vmatpush2.msra.mxu0 0.0
  %218 = vmatprep.subr.mxu0 0.0
  %219 = vmatpush2.msra.mxu0 0.0
  %220 = vmatprep.subr.mxu0 0.0
  %221 = vmatpush2.msra.mxu0 0.0
  %222 = vmatprep.subr.mxu0 0.0
  %223 = vmatpush2.msra.mxu0 0.0
  %224 = vmatprep.subr.mxu0 0.0
  %225 = vmatpush2.msra.mxu0 0.0
  %226 = vmatprep.subr.mxu0 0.0
  %227 = vmatpush2.msra.mxu0 0.0
  %228 = vmatprep.subr.mxu0 0.0
  %229 = vmatpush2.msra.mxu0 0.0
  %230 = vmatprep.subr.mxu0 0.0
  %231 = vmatpush2.msra.mxu0 0.0
  %232 = vmatprep.subr.mxu0 0.0
  %233 = vmatpush2.msra.mxu0 0.0
  %234 = vmatprep.subr.mxu0 0.0
  %235 = vmatpush2.msra.mxu0 0.0
  %236 = vmatprep.subr.mxu0 0.0
  %237 = vmatpush2.msra.mxu0 0.0
  %238 = vmatprep.mubr.f32.mxu0 0.0
  %239 = vmatmul.mubr.f32.gmra.mxu0 %v134
  %v240 = vpop.f32.mrf.mxu0
  %v241 = vadd.f32 %v36, %v240
  %v242 = vpop.f32.mrf.mxu0
  %243 = vmatprep.mubr.f32.mxu0 0.0
  %244 = vmatmul.mubr.f32.gmra.mxu0 %v136
  %v245 = vpop.f32.mrf.mxu0
  %v246 = vadd.f32 %v41, %v245
  %v247 = vpop.f32.mrf.mxu0
  %248 = vmatprep.mubr.f32.mxu0 0.0
  %249 = vmatmul.mubr.f32.gmra.mxu0 %v138
  %v250 = vpop.f32.mrf.mxu0
  %v251 = vadd.f32 %v46, %v250
  %v252 = vpop.f32.mrf.mxu0
  %253 = vmatprep.mubr.f32.mxu0 0.0
  %254 = vmatmul.mubr.f32.gmra.mxu0 %v140
  %v255 = vpop.f32.mrf.mxu0
  %v256 = vadd.f32 %v51, %v255
  %v257 = vpop.f32.mrf.mxu0
  %258 = vmatprep.mubr.f32.mxu0 0.0
  %259 = vmatmul.mubr.f32.gmra.mxu0 %v142
  %v260 = vpop.f32.mrf.mxu0
  %v261 = vadd.f32 %v56, %v260
  %v262 = vpop.f32.mrf.mxu0
  %263 = vmatprep.mubr.f32.mxu0 0.0
  %264 = vmatmul.mubr.f32.gmra.mxu0 %v144
  %v265 = vpop.f32.mrf.mxu0
  %v266 = vadd.f32 %v61, %v265
  %v267 = vpop.f32.mrf.mxu0
  %268 = vmatprep.mubr.f32.mxu0 0.0
  %269 = vmatmul.mubr.f32.gmra.mxu0 %v146
  %v270 = vpop.f32.mrf.mxu0
  %v271 = vadd.f32 %v66, %v270
  %v272 = vpop.f32.mrf.mxu0
  %273 = vmatprep.mubr.f32.mxu0 0.0
  %274 = vmatmul.mubr.f32.gmra.mxu0 %v148
  %v275 = vpop.f32.mrf.mxu0
  %v276 = vadd.f32 %v71, %v275
  %v277 = vpop.f32.mrf.mxu0
  %278 = vmatprep.mubr.f32.mxu0 0.0
  %279 = vmatmul.mubr.f32.gmra.mxu0 %v150
  %v280 = vpop.f32.mrf.mxu0
  %v281 = vadd.f32 %v76, %v280
  %v282 = vpop.f32.mrf.mxu0
  %283 = vmatprep.mubr.f32.mxu0 0.0
  %284 = vmatmul.mubr.f32.gmra.mxu0 %v152
  %v285 = vpop.f32.mrf.mxu0
  %v286 = vadd.f32 %v81, %v285
  %v287 = vpop.f32.mrf.mxu0
  %288 = vmatprep.mubr.f32.mxu0 0.0
  %289 = vmatmul.mubr.f32.gmra.mxu0 %v154
  %v290 = vpop.f32.mrf.mxu0
  %v291 = vadd.f32 %v86, %v290
  %v292 = vpop.f32.mrf.mxu0
  %293 = vmatprep.mubr.f32.mxu0 0.0
  %294 = vmatmul.mubr.f32.gmra.mxu0 %v156
  %v295 = vpop.f32.mrf.mxu0
  %v296 = vadd.f32 %v91, %v295
  %v297 = vpop.f32.mrf.mxu0
  %298 = vmatprep.mubr.f32.mxu0 0.0
  %299 = vmatmul.mubr.f32.gmra.mxu0 %v158
  %v300 = vpop.f32.mrf.mxu0
  %v301 = vadd.f32 %v96, %v300
  %v302 = vpop.f32.mrf.mxu0
  %303 = vmatprep.mubr.f32.mxu0 0.0
  %304 = vmatmul.mubr.f32.gmra.mxu0 %v160
  %v305 = vpop.f32.mrf.mxu0
  %v306 = vadd.f32 %v101, %v305
  %v307 = vpop.f32.mrf.mxu0
  %308 = vmatprep.mubr.f32.mxu0 0.0
  %309 = vmatmul.mubr.f32.gmra.mxu0 %v162
  %v310 = vpop.f32.mrf.mxu0
  %v311 = vadd.f32 %v106, %v310
  %v312 = vpop.f32.mrf.mxu0
  %313 = vmatprep.mubr.f32.mxu0 0.0
  %314 = vmatmul.mubr.f32.gmra.mxu0 %v164
  %v315 = vpop.f32.mrf.mxu0
  %v316 = vadd.f32 %v111, %v315
  %v317 = vpop.f32.mrf.mxu0
  %318 = vmatprep.mubr.f32.mxu0 0.0
  %319 = vmatmul.mubr.f32.gmra.mxu0 %v166
  %v320 = vpop.f32.mrf.mxu0
  %v321 = vadd.f32 %v116, %v320
  %v322 = vpop.f32.mrf.mxu0
  %323 = vmatprep.mubr.f32.mxu0 0.0
  %324 = vmatmul.mubr.f32.gmra.mxu0 %v168
  %v325 = vpop.f32.mrf.mxu0
  %v326 = vadd.f32 %v121, %v325
  %v327 = vpop.f32.mrf.mxu0
  %328 = vmatprep.mubr.f32.mxu0 0.0
  %329 = vmatmul.mubr.f32.gmra.mxu0 %v170
  %v330 = vpop.f32.mrf.mxu0
  %v331 = vadd.f32 %v126, %v330
  %v332 = vpop.f32.mrf.mxu0
  %333 = vmatprep.mubr.f32.mxu0 0.0
  %334 = vmatmul.mubr.f32.gmra.mxu0 %v172
  %v335 = vpop.f32.mrf.mxu0
  %v336 = vadd.f32 %v131, %v335
  %v337 = vpop.f32.mrf.mxu0
  %338 = vdwg.mxu0
  %v339 = vmul.f32 %v241, 0.5
  %v340 = vmul.f32 %v246, 0.5
  %v341 = vmul.f32 %v251, 0.5
  %v342 = vmul.f32 %v256, 0.5
  %v343 = vmul.f32 %v261, 0.5
  %v344 = vmul.f32 %v266, 0.5
  %v345 = vmul.f32 %v271, 0.5
  %v346 = vmul.f32 %v276, 0.5
  %v347 = vmul.f32 %v281, 0.5
  %v348 = vmul.f32 %v286, 0.5
  %v349 = vmul.f32 %v291, 0.5
  %v350 = vmul.f32 %v296, 0.5
  %v351 = vmul.f32 %v301, 0.5
  %v352 = vmul.f32 %v306, 0.5
  %v353 = vmul.f32 %v311, 0.5
  %v354 = vmul.f32 %v316, 0.5
  %v355 = vmul.f32 %v321, 0.5
  %v356 = vmul.f32 %v326, 0.5
  %v357 = vmul.f32 %v331, 0.5
  %v358 = vmul.f32 %v336, 0.5
  %v359 = vtanh.pop %v339
  %v360 = vtanh.pop %v340
  %v361 = vtanh.pop %v341
  %v362 = vtanh.pop %v342
  %v363 = vtanh.pop %v343
  %v364 = vtanh.pop %v344
  %v365 = vtanh.pop %v345
  %v366 = vtanh.pop %v346
  %v367 = vtanh.pop %v347
  %v368 = vtanh.pop %v348
  %v369 = vtanh.pop %v349
  %v370 = vtanh.pop %v350
  %v371 = vtanh.pop %v351
  %v372 = vtanh.pop %v352
  %v373 = vtanh.pop %v353
  %v374 = vtanh.pop %v354
  %v375 = vtanh.pop %v355
  %v376 = vtanh.pop %v356
  %v377 = vtanh.pop %v357
  %v378 = vtanh.pop %v358
  %v379 = vmul.f32 %v359, 0.5
  %v380 = vmul.f32 %v360, 0.5
  %v381 = vmul.f32 %v361, 0.5
  %v382 = vmul.f32 %v362, 0.5
  %v383 = vmul.f32 %v363, 0.5
  %v384 = vmul.f32 %v364, 0.5
  %v385 = vmul.f32 %v365, 0.5
  %v386 = vmul.f32 %v366, 0.5
  %v387 = vmul.f32 %v367, 0.5
  %v388 = vmul.f32 %v368, 0.5
  %v389 = vmul.f32 %v369, 0.5
  %v390 = vmul.f32 %v370, 0.5
  %v391 = vmul.f32 %v371, 0.5
  %v392 = vmul.f32 %v372, 0.5
  %v393 = vmul.f32 %v373, 0.5
  %v394 = vmul.f32 %v374, 0.5
  %v395 = vmul.f32 %v375, 0.5
  %v396 = vmul.f32 %v376, 0.5
  %v397 = vmul.f32 %v377, 0.5
  %v398 = vmul.f32 %v378, 0.5
  %v399 = vadd.f32 %v379, 0.5
  %v400 = vadd.f32 %v380, 0.5
  %v401 = vadd.f32 %v381, 0.5
  %v402 = vadd.f32 %v382, 0.5
  %v403 = vadd.f32 %v383, 0.5
  %v404 = vadd.f32 %v384, 0.5
  %v405 = vadd.f32 %v385, 0.5
  %v406 = vadd.f32 %v386, 0.5
  %v407 = vadd.f32 %v387, 0.5
  %v408 = vadd.f32 %v388, 0.5
  %v409 = vadd.f32 %v389, 0.5
  %v410 = vadd.f32 %v390, 0.5
  %v411 = vadd.f32 %v391, 0.5
  %v412 = vadd.f32 %v392, 0.5
  %v413 = vadd.f32 %v393, 0.5
  %v414 = vadd.f32 %v394, 0.5
  %v415 = vadd.f32 %v395, 0.5
  %v416 = vadd.f32 %v396, 0.5
  %v417 = vadd.f32 %v397, 0.5
  %v418 = vadd.f32 %v398, 0.5
  %v419 = vld [vmem:[%s1] sm:$0xff]
  %v420 = vld [vmem:[%s1 + $0x8] sm:$0xff]
  %v421 = vld [vmem:[%s1 + $0x10] sm:$0xff]
  %v422 = vld [vmem:[%s1 + $0x18] sm:$0xff]
  %v423 = vld [vmem:[%s1 + $0x20] sm:$0xff]
  %v424 = vld [vmem:[%s1 + $0x28] sm:$0xff]
  %v425 = vld [vmem:[%s1 + $0x30] sm:$0xff]
  %v426 = vld [vmem:[%s1 + $0x38] sm:$0xff]
  %v427 = vld [vmem:[%s1 + $0x40] sm:$0xff]
  %v428 = vld [vmem:[%s1 + $0x50] sm:$0xff]
  %v429 = vld [vmem:[%s1 + $0x60] sm:$0xff]
  %v430 = vld [vmem:[%s1 + $0x70] sm:$0xff]
  %432 = vset.pattern.permute.xlu0 32
  %433 = vperm.xlu0 %432, %v427
  %v434 = vpop.permute.xlu0 %433
  %437 = vset.pattern.permute.xlu0 32
  %438 = vperm.xlu0 %437, %v428
  %v439 = vpop.permute.xlu0 %438
  %442 = vset.pattern.permute.xlu0 32
  %443 = vperm.xlu0 %442, %v429
  %v444 = vpop.permute.xlu0 %443
  %447 = vset.pattern.permute.xlu0 32
  %448 = vperm.xlu0 %447, %v430
  %v449 = vpop.permute.xlu0 %448
  %vm451 = vcmask 261120
  %v453 = vsel %vm451, %v420, 0
  %v456 = vsel %vm451, %v422, 0
  %v459 = vsel %vm451, %v424, 0
  %v462 = vsel %vm451, %v426, 0
  %464 = vmatprep.subr.mxu0 0.0
  %465 = vmatpush1.msra.mxu0 %v414
  %466 = vmatprep.subr.mxu0 0.0
  %467 = vmatpush1.msra.mxu0 %v413
  %468 = vmatprep.subr.mxu0 0.0
  %469 = vmatpush1.msra.mxu0 %v412
  %470 = vmatprep.subr.mxu0 0.0
  %471 = vmatpush1.msra.mxu0 %v411
  %472 = vmatprep.subr.mxu0 0.0
  %473 = vmatpush1.msra.mxu0 %v410
  %474 = vmatprep.subr.mxu0 0.0
  %475 = vmatpush1.msra.mxu0 %v409
  %476 = vmatprep.subr.mxu0 0.0
  %477 = vmatpush1.msra.mxu0 %v408
  %478 = vmatprep.subr.mxu0 0.0
  %479 = vmatpush1.msra.mxu0 %v407
  %480 = vmatprep.subr.mxu0 0.0
  %481 = vmatpush1.msra.mxu0 %v406
  %482 = vmatprep.subr.mxu0 0.0
  %483 = vmatpush1.msra.mxu0 %v405
  %484 = vmatprep.subr.mxu0 0.0
  %485 = vmatpush1.msra.mxu0 %v404
  %486 = vmatprep.subr.mxu0 0.0
  %487 = vmatpush1.msra.mxu0 %v403
  %488 = vmatprep.subr.mxu0 0.0
  %489 = vmatpush1.msra.mxu0 %v402
  %490 = vmatprep.subr.mxu0 0.0
  %491 = vmatpush1.msra.mxu0 %v401
  %492 = vmatprep.subr.mxu0 0.0
  %493 = vmatpush1.msra.mxu0 %v400
  %494 = vmatprep.subr.mxu0 0.0
  %495 = vmatpush1.msra.mxu0 %v399
  %496 = vmatprep.subr.mxu0 0.0
  %497 = vmatpush2.msra.mxu0 0.0
  %498 = vmatprep.subr.mxu0 0.0
  %499 = vmatpush2.msra.mxu0 0.0
  %500 = vmatprep.subr.mxu0 0.0
  %501 = vmatpush2.msra.mxu0 0.0
  %502 = vmatprep.subr.mxu0 0.0
  %503 = vmatpush2.msra.mxu0 0.0
  %504 = vmatprep.subr.mxu0 0.0
  %505 = vmatpush2.msra.mxu0 0.0
  %506 = vmatprep.subr.mxu0 0.0
  %507 = vmatpush2.msra.mxu0 0.0
  %508 = vmatprep.subr.mxu0 0.0
  %509 = vmatpush2.msra.mxu0 0.0
  %510 = vmatprep.subr.mxu0 0.0
  %511 = vmatpush2.msra.mxu0 0.0
  %512 = vmatprep.subr.mxu0 0.0
  %513 = vmatpush2.msra.mxu0 0.0
  %514 = vmatprep.subr.mxu0 0.0
  %515 = vmatpush2.msra.mxu0 0.0
  %516 = vmatprep.subr.mxu0 0.0
  %517 = vmatpush2.msra.mxu0 0.0
  %518 = vmatprep.subr.mxu0 0.0
  %519 = vmatpush2.msra.mxu0 0.0
  %520 = vmatprep.subr.mxu0 0.0
  %521 = vmatpush2.msra.mxu0 %v418
  %522 = vmatprep.subr.mxu0 0.0
  %523 = vmatpush2.msra.mxu0 %v417
  %524 = vmatprep.subr.mxu0 0.0
  %525 = vmatpush2.msra.mxu0 %v416
  %526 = vmatprep.subr.mxu0 0.0
  %527 = vmatpush2.msra.mxu0 %v415
  %528 = vmatprep.mubr.f32.mxu0 %v453
  %529 = vmatmul.mubr.f32.gmra.mxu0 %v419
  %v530 = vpop.f32.mrf.mxu0
  %v531 = vadd.f32 %v434, %v530
  %v532 = vpop.f32.mrf.mxu0
  %533 = vmatprep.mubr.f32.mxu0 %v456
  %534 = vmatmul.mubr.f32.gmra.mxu0 %v421
  %v535 = vpop.f32.mrf.mxu0
  %v536 = vadd.f32 %v439, %v535
  %v537 = vpop.f32.mrf.mxu0
  %538 = vmatprep.mubr.f32.mxu0 %v459
  %539 = vmatmul.mubr.f32.gmra.mxu0 %v423
  %v540 = vpop.f32.mrf.mxu0
  %v541 = vadd.f32 %v444, %v540
  %v542 = vpop.f32.mrf.mxu0
  %543 = vmatprep.mubr.f32.mxu0 %v462
  %544 = vmatmul.mubr.f32.gmra.mxu0 %v425
  %v545 = vpop.f32.mrf.mxu0
  %v546 = vadd.f32 %v449, %v545
  %v547 = vpop.f32.mrf.mxu0
  %548 = vdwg.mxu0
  %v549 = vmax.f32 %v531, 0.0
  %v550 = vmax.f32 %v536, 0.0
  %v551 = vmax.f32 %v541, 0.0
  %v552 = vmax.f32 %v546, 0.0
  %553 = vset.pattern.permute.xlu0 33
  %554 = vperm.xlu0 %553, %v427
  %v555 = vpop.permute.xlu0 %554
  %557 = vset.pattern.permute.xlu0 33
  %558 = vperm.xlu0 %557, %v428
  %v559 = vpop.permute.xlu0 %558
  %561 = vset.pattern.permute.xlu0 33
  %562 = vperm.xlu0 %561, %v429
  %v563 = vpop.permute.xlu0 %562
  %565 = vset.pattern.permute.xlu0 33
  %566 = vperm.xlu0 %565, %v430
  %v567 = vpop.permute.xlu0 %566
  %v569 = vsel %vm451, %v427, 0
  %v571 = vsel %vm451, %v428, 0
  %v573 = vsel %vm451, %v429, 0
  %v575 = vsel %vm451, %v430, 0
  %577 = vmatprep.subr.mxu0 0.0
  %578 = vmatpush1.msra.mxu0 0.0
  %579 = vmatprep.subr.mxu0 0.0
  %580 = vmatpush1.msra.mxu0 0.0
  %581 = vmatprep.subr.mxu0 0.0
  %582 = vmatpush1.msra.mxu0 0.0
  %583 = vmatprep.subr.mxu0 0.0
  %584 = vmatpush1.msra.mxu0 0.0
  %585 = vmatprep.subr.mxu0 0.0
  %586 = vmatpush1.msra.mxu0 0.0
  %587 = vmatprep.subr.mxu0 0.0
  %588 = vmatpush1.msra.mxu0 0.0
  %589 = vmatprep.subr.mxu0 0.0
  %590 = vmatpush1.msra.mxu0 0.0
  %591 = vmatprep.subr.mxu0 0.0
  %592 = vmatpush1.msra.mxu0 0.0
  %593 = vmatprep.subr.mxu0 0.0
  %594 = vmatpush1.msra.mxu0 0.0
  %595 = vmatprep.subr.mxu0 0.0
  %596 = vmatpush1.msra.mxu0 0.0
  %597 = vmatprep.subr.mxu0 0.0
  %598 = vmatpush1.msra.mxu0 0.0
  %599 = vmatprep.subr.mxu0 0.0
  %600 = vmatpush1.msra.mxu0 0.0
  %601 = vmatprep.subr.mxu0 0.0
  %602 = vmatpush1.msra.mxu0 %v552
  %603 = vmatprep.subr.mxu0 0.0
  %604 = vmatpush1.msra.mxu0 %v551
  %605 = vmatprep.subr.mxu0 0.0
  %606 = vmatpush1.msra.mxu0 %v550
  %607 = vmatprep.subr.mxu0 0.0
  %608 = vmatpush1.msra.mxu0 %v549
  %609 = vmatprep.subr.mxu0 0.0
  %610 = vmatpush2.msra.mxu0 0.0
  %611 = vmatprep.subr.mxu0 0.0
  %612 = vmatpush2.msra.mxu0 0.0
  %613 = vmatprep.subr.mxu0 0.0
  %614 = vmatpush2.msra.mxu0 0.0
  %615 = vmatprep.subr.mxu0 0.0
  %616 = vmatpush2.msra.mxu0 0.0
  %617 = vmatprep.subr.mxu0 0.0
  %618 = vmatpush2.msra.mxu0 0.0
  %619 = vmatprep.subr.mxu0 0.0
  %620 = vmatpush2.msra.mxu0 0.0
  %621 = vmatprep.subr.mxu0 0.0
  %622 = vmatpush2.msra.mxu0 0.0
  %623 = vmatprep.subr.mxu0 0.0
  %624 = vmatpush2.msra.mxu0 0.0
  %625 = vmatprep.subr.mxu0 0.0
  %626 = vmatpush2.msra.mxu0 0.0
  %627 = vmatprep.subr.mxu0 0.0
  %628 = vmatpush2.msra.mxu0 0.0
  %629 = vmatprep.subr.mxu0 0.0
  %630 = vmatpush2.msra.mxu0 0.0
  %631 = vmatprep.subr.mxu0 0.0
  %632 = vmatpush2.msra.mxu0 0.0
  %633 = vmatprep.subr.mxu0 0.0
  %634 = vmatpush2.msra.mxu0 0.0
  %635 = vmatprep.subr.mxu0 0.0
  %636 = vmatpush2.msra.mxu0 0.0
  %637 = vmatprep.subr.mxu0 0.0
  %638 = vmatpush2.msra.mxu0 0.0
  %639 = vmatprep.subr.mxu0 0.0
  %640 = vmatpush2.msra.mxu0 0.0
  %641 = vmatprep.mubr.f32.mxu0 0.0
  %642 = vmatmul.mubr.f32.gmra.mxu0 %v569
  %v643 = vpop.f32.mrf.mxu0
  %v644 = vadd.f32 %v555, %v643
  %v645 = vpop.f32.mrf.mxu0
  %646 = vmatprep.mubr.f32.mxu0 0.0
  %647 = vmatmul.mubr.f32.gmra.mxu0 %v571
  %v648 = vpop.f32.mrf.mxu0
  %v649 = vadd.f32 %v559, %v648
  %v650 = vpop.f32.mrf.mxu0
  %651 = vmatprep.mubr.f32.mxu0 0.0
  %652 = vmatmul.mubr.f32.gmra.mxu0 %v573
  %v653 = vpop.f32.mrf.mxu0
  %v654 = vadd.f32 %v563, %v653
  %v655 = vpop.f32.mrf.mxu0
  %656 = vmatprep.mubr.f32.mxu0 0.0
  %657 = vmatmul.mubr.f32.gmra.mxu0 %v575
  %v658 = vpop.f32.mrf.mxu0
  %v659 = vadd.f32 %v567, %v658
  %v660 = vpop.f32.mrf.mxu0
  %661 = vdwg.mxu0
  %v662 = vmax.f32 %v644, 0.0
  %v663 = vmax.f32 %v649, 0.0
  %v664 = vmax.f32 %v654, 0.0
  %v665 = vmax.f32 %v659, 0.0
  %v666 = vld [vmem:[%s1 + $0x80] sm:$0xff]
  %668 = vset.pattern.permute.xlu0 32
  %669 = vperm.xlu0 %668, %v666
  %v670 = vpop.permute.xlu0 %669
  %v672 = vsel %vm451, %v666, 0
  %674 = vmatprep.subr.mxu0 0.0
  %675 = vmatpush1.msra.mxu0 0.0
  %676 = vmatprep.subr.mxu0 0.0
  %677 = vmatpush1.msra.mxu0 0.0
  %678 = vmatprep.subr.mxu0 0.0
  %679 = vmatpush1.msra.mxu0 0.0
  %680 = vmatprep.subr.mxu0 0.0
  %681 = vmatpush1.msra.mxu0 0.0
  %682 = vmatprep.subr.mxu0 0.0
  %683 = vmatpush1.msra.mxu0 0.0
  %684 = vmatprep.subr.mxu0 0.0
  %685 = vmatpush1.msra.mxu0 0.0
  %686 = vmatprep.subr.mxu0 0.0
  %687 = vmatpush1.msra.mxu0 0.0
  %688 = vmatprep.subr.mxu0 0.0
  %689 = vmatpush1.msra.mxu0 0.0
  %690 = vmatprep.subr.mxu0 0.0
  %691 = vmatpush1.msra.mxu0 0.0
  %692 = vmatprep.subr.mxu0 0.0
  %693 = vmatpush1.msra.mxu0 0.0
  %694 = vmatprep.subr.mxu0 0.0
  %695 = vmatpush1.msra.mxu0 0.0
  %696 = vmatprep.subr.mxu0 0.0
  %697 = vmatpush1.msra.mxu0 0.0
  %698 = vmatprep.subr.mxu0 0.0
  %699 = vmatpush1.msra.mxu0 %v665
  %700 = vmatprep.subr.mxu0 0.0
  %701 = vmatpush1.msra.mxu0 %v664
  %702 = vmatprep.subr.mxu0 0.0
  %703 = vmatpush1.msra.mxu0 %v663
  %704 = vmatprep.subr.mxu0 0.0
  %705 = vmatpush1.msra.mxu0 %v662
  %706 = vmatprep.subr.mxu0 0.0
  %707 = vmatpush2.msra.mxu0 0.0
  %708 = vmatprep.subr.mxu0 0.0
  %709 = vmatpush2.msra.mxu0 0.0
  %710 = vmatprep.subr.mxu0 0.0
  %711 = vmatpush2.msra.mxu0 0.0
  %712 = vmatprep.subr.mxu0 0.0
  %713 = vmatpush2.msra.mxu0 0.0
  %714 = vmatprep.subr.mxu0 0.0
  %715 = vmatpush2.msra.mxu0 0.0
  %716 = vmatprep.subr.mxu0 0.0
  %717 = vmatpush2.msra.mxu0 0.0
  %718 = vmatprep.subr.mxu0 0.0
  %719 = vmatpush2.msra.mxu0 0.0
  %720 = vmatprep.subr.mxu0 0.0
  %721 = vmatpush2.msra.mxu0 0.0
  %722 = vmatprep.subr.mxu0 0.0
  %723 = vmatpush2.msra.mxu0 0.0
  %724 = vmatprep.subr.mxu0 0.0
  %725 = vmatpush2.msra.mxu0 0.0
  %726 = vmatprep.subr.mxu0 0.0
  %727 = vmatpush2.msra.mxu0 0.0
  %728 = vmatprep.subr.mxu0 0.0
  %729 = vmatpush2.msra.mxu0 0.0
  %730 = vmatprep.subr.mxu0 0.0
  %731 = vmatpush2.msra.mxu0 0.0
  %732 = vmatprep.subr.mxu0 0.0
  %733 = vmatpush2.msra.mxu0 0.0
  %734 = vmatprep.subr.mxu0 0.0
  %735 = vmatpush2.msra.mxu0 0.0
  %736 = vmatprep.subr.mxu0 0.0
  %737 = vmatpush2.msra.mxu0 0.0
  %738 = vmatprep.mubr.f32.mxu0 0.0
  %739 = vmatmul.mubr.f32.gmra.mxu0 %v672
  %v740 = vpop.f32.mrf.mxu0
  %v741 = vadd.f32 %v670, %v740
  %v742 = vpop.f32.mrf.mxu0
  %743 = vdwg.mxu0
  %v744 = vtanh.pop %v741
  %v745 = vmul.f32 %v744, 2.0
  %vm746 = vcmask 11264
  %747 = vst.msk [vmem:[%s2] sm:$0xf] %vm746, %v745
  // Predicated region
  $region10: #{tpu_custom_call.1} parent=0 // pred_check
    _
  $region11: #{tpu_custom_call.1} parent=0 // pred_check_branch
    %749 = sbr.rel (0) target = $region13
  $region12: #{tpu_custom_call.1} parent=0 // pred_region
    _
  $region13: #{tpu_custom_call.1} parent=0 // pred_fallthru
    _
  // Predicated region
  $region14: #{tpu_custom_call.1} parent=0 // pred_check
    _
  $region15: #{tpu_custom_call.1} parent=0 // pred_check_branch
    %751 = sbr.rel (0) target = $region17
  $region16: #{tpu_custom_call.1} parent=0 // pred_region
    _
  $region17: #{tpu_custom_call.1} parent=0 // pred_fallthru
    _

</llo_original>
